<compile_context>
chip_gen: v7x
topology: tpu7x:2x2x1
jax: 0.10.0
libtpu: 0.0.40
codegen_flags: <defaults>
</compile_context>

<pallas_src>
import functools

import numpy as np
import jax
import jax.numpy as jnp
from jax import lax
from jax.experimental import pallas as pl
from jax.experimental.pallas import tpu as pltpu

CONV_OUT = 64        # conv1 out channels
PRED_LEN = 24        # Config.pred_len


def _timesnet_kernel(x_ref, wtap_ref, bconv_ref, pool_ref, wfc_ref, bfc_ref,
                     o_ref, *, chunk_b, seq_len, pred_len, compute_dtype):
    """Fused conv1d(k=3,pad=1)+ReLU -> adaptive avg pool -> linear, one batch chunk.

    x_ref:     (Bc*L, Cin)       flat input rows, (batch, position)-major
    wtap_ref:  (3, Cin, 64)      conv taps for [x[l-1], x[l], x[l+1]]
    bconv_ref: (1, 64)           conv bias (f32)
    pool_ref:  (pred_len, L)     per-sequence adaptive-avg-pool matrix
    wfc_ref:   (64, Cin)         fc weight, transposed for x @ W
    bfc_ref:   (1, Cin)          fc bias (f32)
    o_ref:     (Bc*pred_len, Cin)
    """
    rows = chunk_b * seq_len
    cin = x_ref.shape[-1]

    x = x_ref[...]                                              # (rows, Cin)

    # ---- Conv1d(k=3, pad=1): taps built in-kernel (no host im2col). ---------
    # Position of each row inside its length-L sequence, for boundary masking
    # (also kills the wrap-around / cross-batch rows produced by the rolls).
    l_pos = lax.broadcasted_iota(jnp.int32, (chunk_b, seq_len, cin), 1)
    l_pos = l_pos.reshape(rows, cin)
    # roll(+1): row r holds x[r-1];  roll(rows-1) == roll(-1): row r holds x[r+1].
    x_prev = jnp.where(l_pos == 0, 0.0, pltpu.roll(x, shift=1, axis=0))
    x_next = jnp.where(l_pos == seq_len - 1, 0.0,
                       pltpu.roll(x, shift=rows - 1, axis=0))

    y = (jnp.dot(x_prev, wtap_ref[0], preferred_element_type=jnp.float32)
         + jnp.dot(x, wtap_ref[1], preferred_element_type=jnp.float32)
         + jnp.dot(x_next, wtap_ref[2], preferred_element_type=jnp.float32))
    y = jnp.maximum(y + bconv_ref[...], 0.0)                    # (rows, 64) f32

    # ---- AdaptiveAvgPool1d(pred_len): batched (pred,L)@(L,64), K = L (not Bc*L).
    y3 = y.astype(compute_dtype).reshape(chunk_b, seq_len, CONV_OUT)
    pool_b = jnp.broadcast_to(pool_ref[...], (chunk_b, pred_len, seq_len))
    pooled = jnp.einsum("bpl,bld->bpd", pool_b, y3,
                        preferred_element_type=jnp.float32)     # (Bc, pred, 64)
    pooled = pooled.reshape(chunk_b * pred_len, CONV_OUT)

    # ---- Linear(64 -> Cin).
    out = jnp.dot(pooled.astype(compute_dtype), wfc_ref[...],
                  preferred_element_type=jnp.float32) + bfc_ref[...]
    # Note: last dim Cin=4 -> masked 4/128-lane store; negligible at this size.
    o_ref[...] = out.astype(o_ref.dtype)                        # one full-block store


@functools.lru_cache(maxsize=None)
def _adaptive_avg_pool_matrix(L, out_len):
    """Pooling matrix with exact torch AdaptiveAvgPool1d window semantics."""
    P = np.zeros((out_len, L), dtype=np.float32)
    for i in range(out_len):
        start = (i * L) // out_len
        end = -((-(i + 1) * L) // out_len)      # ceil((i+1)*L/out_len)
        P[i, start:end] = 1.0 / (end - start)
    return P


def _num_batch_chunks(batch, seq_len):
    """Split the batch only on multi-TensorCore parts (v7x) and only when each
    chunk has enough rows to amortize the extra grid step / duplicated DMAs."""
    try:
        kind = jax.devices()[0].device_kind.lower()
    except Exception:
        kind = ""
    multi_tc = "v7" in kind                      # v7x has 2 TensorCores per chip
    chunk_rows = (batch // 2) * seq_len
    if (multi_tc and batch % 2 == 0 and chunk_rows >= 512
            and chunk_rows % 8 == 0 and ((batch // 2) * PRED_LEN) % 8 == 0):
        return 2
    return 1


def _invariant_spec(shape):
    """BlockSpec for a grid-invariant operand; single-buffered when supported."""
    index_map = lambda i: (0,) * len(shape)
    try:
        return pl.BlockSpec(shape, index_map, pipeline_mode=pl.Buffered(1))
    except Exception:  # API without pipeline_mode / Buffered: plain (double-buffered)
        return pl.BlockSpec(shape, index_map)


@functools.partial(jax.jit, static_argnames=("compute_dtype",))
def simple_timesnet_forward(x, conv_w, conv_b, fc_w, fc_b,
                            compute_dtype=jnp.float32):
    """x: (B, L, Cin); conv_w: (64, Cin, 3); conv_b: (64,);
    fc_w: (Cin, 64); fc_b: (Cin,)   (torch parameter layouts)."""
    B, L, Cin = x.shape

    num_chunks = _num_batch_chunks(B, L)
    chunk_b = B // num_chunks
    rows_in = chunk_b * L
    rows_out = chunk_b * PRED_LEN

    # ---- tiny host/XLA-side prep (weight relayouts only; no data inflation) --
    x_flat = x.reshape(B * L, Cin).astype(compute_dtype)
    wtap = jnp.transpose(conv_w, (2, 1, 0)).astype(compute_dtype)   # (3, Cin, 64)
    bconv = conv_b.reshape(1, CONV_OUT).astype(jnp.float32)
    pool = jnp.asarray(_adaptive_avg_pool_matrix(L, PRED_LEN)).astype(compute_dtype)
    wfc = jnp.transpose(fc_w).astype(compute_dtype)                 # (64, Cin)
    bfc = fc_b.reshape(1, Cin).astype(jnp.float32)

    # ---- explicit scoped-VMEM budget (generous; floor >= every default limit) -
    item = jnp.dtype(compute_dtype).itemsize
    est = (2 * rows_in * 128 * item                 # x, double-buffered, lane-padded
           + 2 * rows_out * 128 * 4                 # out, double-buffered
           + 8 * rows_in * 128 * 4                  # in-kernel temporaries (taps, y)
           + (3 * Cin * CONV_OUT + PRED_LEN * L + CONV_OUT * Cin
              + CONV_OUT + Cin) * 4)                # weights / pool / biases
    vmem_limit = int(min(max(2 * est, 16 * 1024 * 1024), 64 * 1024 * 1024))

    kernel = functools.partial(_timesnet_kernel, chunk_b=chunk_b, seq_len=L,
                               pred_len=PRED_LEN, compute_dtype=compute_dtype)

    out_flat = pl.pallas_call(
        kernel,
        out_shape=jax.ShapeDtypeStruct((B * PRED_LEN, Cin), jnp.float32),
        grid_spec=pltpu.PrefetchScalarGridSpec(
            num_scalar_prefetch=0,
            grid=(num_chunks,),
            in_specs=[
                pl.BlockSpec((rows_in, Cin), lambda i: (i, 0)),     # x (chunked)
                _invariant_spec((3, Cin, CONV_OUT)),                # conv taps
                _invariant_spec((1, CONV_OUT)),                     # conv bias
                _invariant_spec((PRED_LEN, L)),                     # pool matrix
                _invariant_spec((CONV_OUT, Cin)),                   # fc weight
                _invariant_spec((1, Cin)),                          # fc bias
            ],
            out_specs=pl.BlockSpec((rows_out, Cin), lambda i: (i, 0)),
        ),
        compiler_params=pltpu.CompilerParams(
            dimension_semantics=("parallel",),
            vmem_limit_bytes=vmem_limit),
    )(x_flat, wtap, bconv, pool, wfc, bfc)

    return out_flat.reshape(B, PRED_LEN, Cin)


def _reference_forward(x, conv_w, conv_b, fc_w, fc_b):
    """Pure-JAX reference reproducing the torch module exactly."""
    B, L, Cin = x.shape
    # Conv1d (NCW) with padding=1, kernel=3.
    x_ncw = jnp.transpose(x, (0, 2, 1))                                # (B, Cin, L)
    y = lax.conv_general_dilated(
        x_ncw, conv_w, window_strides=(1,), padding=((1, 1),),
        dimension_numbers=("NCH", "OIH", "NCH"))                       # (B, 64, L)
    y = jax.nn.relu(y + conv_b[None, :, None])
    # AdaptiveAvgPool1d via the exact torch window formula.
    P = jnp.asarray(_adaptive_avg_pool_matrix(L, PRED_LEN))            # (pred, L)
    pooled = jnp.einsum("bcl,pl->bcp", y, P)                           # (B, 64, pred)
    pooled = jnp.transpose(pooled, (0, 2, 1))                          # (B, pred, 64)
    return pooled @ fc_w.T + fc_b


if __name__ == "__main__":
    key = jax.random.PRNGKey(0)
    k1, k2, k3, k4, k5 = jax.random.split(key, 5)

    B, L, Cin = 2, 48, 4   # small shapes: batch=2, seq=48, input_dim=4

    x = jax.random.normal(k1, (B, L, Cin), dtype=jnp.float32)
    # Deterministic synthetic parameters (torch layouts).
    conv_w = jax.random.normal(k2, (CONV_OUT, Cin, 3), dtype=jnp.float32) * 0.1
    conv_b = jax.random.normal(k3, (CONV_OUT,), dtype=jnp.float32) * 0.1
    fc_w = jax.random.normal(k4, (Cin, CONV_OUT), dtype=jnp.float32) * 0.1
    fc_b = jax.random.normal(k5, (Cin,), dtype=jnp.float32) * 0.1

    out = jax.block_until_ready(simple_timesnet_forward(x, conv_w, conv_b, fc_w, fc_b))
    ref = jax.block_until_ready(_reference_forward(x, conv_w, conv_b, fc_w, fc_b))

    assert out.shape == (B, PRED_LEN, Cin), out.shape
    np.testing.assert_allclose(np.asarray(out), np.asarray(ref), rtol=1e-5, atol=1e-5)

    print("KERNEL_OK")
</pallas_src>

<mosaic_0001>
module attributes {stable_mosaic.version = 11 : i64} {
  func.func @_timesnet_kernel(%arg0: i32, %arg1: memref<96x4xf32, #tpu.memory_space<vmem>>, %arg2: memref<3x4x64xf32, #tpu.memory_space<vmem>>, %arg3: memref<1x64xf32, #tpu.memory_space<vmem>>, %arg4: memref<24x48xf32, #tpu.memory_space<vmem>>, %arg5: memref<64x4xf32, #tpu.memory_space<vmem>>, %arg6: memref<1x4xf32, #tpu.memory_space<vmem>>, %arg7: memref<48x4xf32, #tpu.memory_space<vmem>>) attributes {dimension_semantics = [#tpu.dimension_semantics<parallel>], iteration_bounds = array<i64: 1>, scalar_prefetch = 0 : i64, scratch_operands = 0 : i64, tpu.core_type = #tpu.core_type<tc>, window_params = [{transform_indices = @transform_0, window_bounds = array<i64: 96, 4>}, {pipeline_mode = #tpu.pipeline_mode<synchronous>, transform_indices = @transform_1, window_bounds = array<i64: 3, 4, 64>}, {pipeline_mode = #tpu.pipeline_mode<synchronous>, transform_indices = @transform_2, window_bounds = array<i64: 1, 64>}, {pipeline_mode = #tpu.pipeline_mode<synchronous>, transform_indices = @transform_3, window_bounds = array<i64: 24, 48>}, {pipeline_mode = #tpu.pipeline_mode<synchronous>, transform_indices = @transform_4, window_bounds = array<i64: 64, 4>}, {pipeline_mode = #tpu.pipeline_mode<synchronous>, transform_indices = @transform_5, window_bounds = array<i64: 1, 4>}, {transform_indices = @transform_6, window_bounds = array<i64: 48, 4>}]} {
    %c0 = arith.constant 0 : index
    %c0_0 = arith.constant 0 : index
    %0 = vector.load %arg1[%c0, %c0_0] : memref<96x4xf32, #tpu.memory_space<vmem>>, vector<96x4xf32>
    %1 = tpu.iota {dimensions = array<i32: 1>} : vector<2x48x4xi32>
    %2 = vector.shape_cast %1 : vector<2x48x4xi32> to vector<96x4xi32>
    %c0_i32 = arith.constant 0 : i32
    %3 = vector.broadcast %c0_i32 : i32 to vector<96x4xi32>
    %4 = arith.cmpi eq, %2, %3 : vector<96x4xi32>
    %c1_i32 = arith.constant 1 : i32
    %5 = tpu.dynamic_rotate %0 by %c1_i32 dim 0 : vector<96x4xf32>, i32 -> vector<96x4xf32>
    %cst = arith.constant 0.000000e+00 : f32
    %6 = vector.broadcast %cst : f32 to vector<96x4xf32>
    %7 = arith.select %4, %6, %5 : vector<96x4xi1>, vector<96x4xf32>
    %c47_i32 = arith.constant 47 : i32
    %8 = vector.broadcast %c47_i32 : i32 to vector<96x4xi32>
    %9 = arith.cmpi eq, %2, %8 : vector<96x4xi32>
    %c95_i32 = arith.constant 95 : i32
    %10 = tpu.dynamic_rotate %0 by %c95_i32 dim 0 : vector<96x4xf32>, i32 -> vector<96x4xf32>
    %cst_1 = arith.constant 0.000000e+00 : f32
    %11 = vector.broadcast %cst_1 : f32 to vector<96x4xf32>
    %12 = arith.select %9, %11, %10 : vector<96x4xi1>, vector<96x4xf32>
    %c0_2 = arith.constant 0 : index
    %c0_3 = arith.constant 0 : index
    %c0_4 = arith.constant 0 : index
    %13 = vector.load %arg2[%c0_2, %c0_3, %c0_4] : memref<3x4x64xf32, #tpu.memory_space<vmem>>, vector<1x4x64xf32>
    %14 = vector.shape_cast %13 : vector<1x4x64xf32> to vector<4x64xf32>
    %cst_5 = arith.constant dense<0.000000e+00> : vector<96x64xf32>
    %15 = tpu.matmul %7, %14, %cst_5 {dimension_numbers = #tpu.dot_dimension_numbers<[1], [0], [0], [1], [0, 0, 1, 1], [], []>} : vector<96x4xf32>, vector<4x64xf32>, vector<96x64xf32> -> vector<96x64xf32>
    %c1 = arith.constant 1 : index
    %c0_6 = arith.constant 0 : index
    %c0_7 = arith.constant 0 : index
    %16 = vector.load %arg2[%c1, %c0_6, %c0_7] : memref<3x4x64xf32, #tpu.memory_space<vmem>>, vector<1x4x64xf32>
    %17 = vector.shape_cast %16 : vector<1x4x64xf32> to vector<4x64xf32>
    %cst_8 = arith.constant dense<0.000000e+00> : vector<96x64xf32>
    %18 = tpu.matmul %0, %17, %cst_8 {dimension_numbers = #tpu.dot_dimension_numbers<[1], [0], [0], [1], [0, 0, 1, 1], [], []>} : vector<96x4xf32>, vector<4x64xf32>, vector<96x64xf32> -> vector<96x64xf32>
    %19 = arith.addf %15, %18 : vector<96x64xf32>
    %c2 = arith.constant 2 : index
    %c0_9 = arith.constant 0 : index
    %c0_10 = arith.constant 0 : index
    %20 = vector.load %arg2[%c2, %c0_9, %c0_10] : memref<3x4x64xf32, #tpu.memory_space<vmem>>, vector<1x4x64xf32>
    %21 = vector.shape_cast %20 : vector<1x4x64xf32> to vector<4x64xf32>
    %cst_11 = arith.constant dense<0.000000e+00> : vector<96x64xf32>
    %22 = tpu.matmul %12, %21, %cst_11 {dimension_numbers = #tpu.dot_dimension_numbers<[1], [0], [0], [1], [0, 0, 1, 1], [], []>} : vector<96x4xf32>, vector<4x64xf32>, vector<96x64xf32> -> vector<96x64xf32>
    %23 = arith.addf %19, %22 : vector<96x64xf32>
    %c0_12 = arith.constant 0 : index
    %c0_13 = arith.constant 0 : index
    %24 = vector.load %arg3[%c0_12, %c0_13] : memref<1x64xf32, #tpu.memory_space<vmem>>, vector<1x64xf32>
    %25 = vector.broadcast %24 : vector<1x64xf32> to vector<96x64xf32>
    %26 = arith.addf %23, %25 : vector<96x64xf32>
    %cst_14 = arith.constant 0.000000e+00 : f32
    %27 = vector.broadcast %cst_14 : f32 to vector<96x64xf32>
    %28 = arith.maximumf %26, %27 : vector<96x64xf32>
    %29 = vector.shape_cast %28 : vector<96x64xf32> to vector<2x48x64xf32>
    %c0_15 = arith.constant 0 : index
    %c0_16 = arith.constant 0 : index
    %30 = vector.load %arg4[%c0_15, %c0_16] : memref<24x48xf32, #tpu.memory_space<vmem>>, vector<24x48xf32>
    %31 = vector.shape_cast %30 : vector<24x48xf32> to vector<1x24x48xf32>
    %32 = vector.broadcast %31 : vector<1x24x48xf32> to vector<2x24x48xf32>
    "tpu.trace_start"() <{level = 10 : i32, message = "bpl,bld->bpd"}> : () -> ()
    %cst_17 = arith.constant dense<0.000000e+00> : vector<2x24x64xf32>
    %33 = tpu.matmul %32, %29, %cst_17 {dimension_numbers = #tpu.dot_dimension_numbers<[2], [1], [1], [2], [0, 0, 0, 1, 1, 2], [0], [0]>} : vector<2x24x48xf32>, vector<2x48x64xf32>, vector<2x24x64xf32> -> vector<2x24x64xf32>
    "tpu.trace_stop"() : () -> ()
    %34 = vector.shape_cast %33 : vector<2x24x64xf32> to vector<48x64xf32>
    %c0_18 = arith.constant 0 : index
    %c0_19 = arith.constant 0 : index
    %35 = vector.load %arg5[%c0_18, %c0_19] : memref<64x4xf32, #tpu.memory_space<vmem>>, vector<64x4xf32>
    %cst_20 = arith.constant dense<0.000000e+00> : vector<48x4xf32>
    %36 = tpu.matmul %34, %35, %cst_20 {dimension_numbers = #tpu.dot_dimension_numbers<[1], [0], [0], [1], [0, 0, 1, 1], [], []>} : vector<48x64xf32>, vector<64x4xf32>, vector<48x4xf32> -> vector<48x4xf32>
    %c0_21 = arith.constant 0 : index
    %c0_22 = arith.constant 0 : index
    %37 = vector.load %arg6[%c0_21, %c0_22] : memref<1x4xf32, #tpu.memory_space<vmem>>, vector<1x4xf32>
    %38 = vector.broadcast %37 : vector<1x4xf32> to vector<48x4xf32>
    %39 = arith.addf %36, %38 : vector<48x4xf32>
    %c0_23 = arith.constant 0 : index
    %c0_24 = arith.constant 0 : index
    %40 = vector.load %arg7[%c0_23, %c0_24] : memref<48x4xf32, #tpu.memory_space<vmem>>, vector<48x4xf32>
    tpu.vector_store %arg7[%c0_23, %c0_24], %39 {strides = array<i32>} : memref<48x4xf32, #tpu.memory_space<vmem>>, vector<48x4xf32>,
    return
  }
  func.func @transform_0(%arg0: i32) -> (i32, i32) {
    %c0_i32 = arith.constant 0 : i32
    %c0_i32_0 = arith.constant 0 : i32
    return %arg0, %c0_i32 : i32, i32
  }
  func.func @transform_1(%arg0: i32) -> (i32, i32, i32) {
    %c0_i32 = arith.constant 0 : i32
    %c0_i32_0 = arith.constant 0 : i32
    %c0_i32_1 = arith.constant 0 : i32
    %c0_i32_2 = arith.constant 0 : i32
    return %c0_i32, %c0_i32_0, %c0_i32_1 : i32, i32, i32
  }
  func.func @transform_2(%arg0: i32) -> (i32, i32) {
    %c0_i32 = arith.constant 0 : i32
    %c0_i32_0 = arith.constant 0 : i32
    %c0_i32_1 = arith.constant 0 : i32
    return %c0_i32, %c0_i32_0 : i32, i32
  }
  func.func @transform_3(%arg0: i32) -> (i32, i32) {
    %c0_i32 = arith.constant 0 : i32
    %c0_i32_0 = arith.constant 0 : i32
    %c0_i32_1 = arith.constant 0 : i32
    return %c0_i32, %c0_i32_0 : i32, i32
  }
  func.func @transform_4(%arg0: i32) -> (i32, i32) {
    %c0_i32 = arith.constant 0 : i32
    %c0_i32_0 = arith.constant 0 : i32
    %c0_i32_1 = arith.constant 0 : i32
    return %c0_i32, %c0_i32_0 : i32, i32
  }
  func.func @transform_5(%arg0: i32) -> (i32, i32) {
    %c0_i32 = arith.constant 0 : i32
    %c0_i32_0 = arith.constant 0 : i32
    %c0_i32_1 = arith.constant 0 : i32
    return %c0_i32, %c0_i32_0 : i32, i32
  }
  func.func @transform_6(%arg0: i32) -> (i32, i32) {
    %c0_i32 = arith.constant 0 : i32
    %c0_i32_0 = arith.constant 0 : i32
    return %arg0, %c0_i32 : i32, i32
  }
}

</mosaic_0001>

<llo_original>
// kernel: simple_timesnet_forward.1
$region0: #{simple_timesnet_forward.1}
  #allocation0 [shape = 'u32[]', space=smem, size = 0x4, offset = 0x4, fixed_abs, tag = 'smem constant byte address 0x4 - core index']
  #allocation1 [shape = 'u32[144,128]{1,0:T(1,128)}', space=vmem, size = 0x12000, scoped, tag = 'internal scratch']
  %s0 = inlined_call_operand.vmem [shape: f32[96,4], index: 0, kind: input, shape index: {}]
  %s1 = inlined_call_operand.vmem [shape: f32[3,4,64], index: 1, kind: input, shape index: {}]
  %s2 = inlined_call_operand.vmem [shape: f32[1,64], index: 2, kind: input, shape index: {}]
  %s3 = inlined_call_operand.vmem [shape: f32[24,48], index: 3, kind: input, shape index: {}]
  %s4 = inlined_call_operand.vmem [shape: f32[64,4], index: 4, kind: input, shape index: {}]
  %s5 = inlined_call_operand.vmem [shape: f32[1,4], index: 5, kind: input, shape index: {}]
  %s6 = inlined_call_operand.vmem [shape: f32[48,4], index: 6, kind: output, shape index: {}]
  %s7 = sld [smem:[#allocation0]]
  $region34: #{simple_timesnet_forward.1} parent=0
    _
  %s9 = ssub.s32 1, %s7
  %s10 = scalar_select 0, %s9, %s7
  // Predicated region
  $region2: #{simple_timesnet_forward.1} parent=0 // pred_check
    _
  $region3: #{simple_timesnet_forward.1} parent=0 // pred_check_branch
    %12 = sbr.rel (0) target = $region5
  $region4: #{simple_timesnet_forward.1} parent=0 // pred_region
    _
  $region5: #{simple_timesnet_forward.1} parent=0 // pred_fallthru
    _
  // Predicated region
  $region6: #{simple_timesnet_forward.1} parent=0 // pred_check
    _
  $region7: #{simple_timesnet_forward.1} parent=0 // pred_check_branch
    %14 = sbr.rel (0) target = $region9
  $region8: #{simple_timesnet_forward.1} parent=0 // pred_region
    _
  $region9: #{simple_timesnet_forward.1} parent=0 // pred_fallthru
    _
  // Predicated region
  $region10: #{simple_timesnet_forward.1} parent=0 // pred_check
    _
  $region11: #{simple_timesnet_forward.1} parent=0 // pred_check_branch
    %16 = sbr.rel (0) target = $region13
  $region12: #{simple_timesnet_forward.1} parent=0 // pred_region
    _
  $region13: #{simple_timesnet_forward.1} parent=0 // pred_fallthru
    _
  // Predicated region
  $region14: #{simple_timesnet_forward.1} parent=0 // pred_check
    _
  $region15: #{simple_timesnet_forward.1} parent=0 // pred_check_branch
    %18 = sbr.rel (0) target = $region17
  $region16: #{simple_timesnet_forward.1} parent=0 // pred_region
    _
  $region17: #{simple_timesnet_forward.1} parent=0 // pred_fallthru
    _
  // Predicated region
  $region18: #{simple_timesnet_forward.1} parent=0 // pred_check
    _
  $region19: #{simple_timesnet_forward.1} parent=0 // pred_check_branch
    %20 = sbr.rel (0) target = $region21
  $region20: #{simple_timesnet_forward.1} parent=0 // pred_region
    _
  $region21: #{simple_timesnet_forward.1} parent=0 // pred_fallthru
    _
  // Predicated region
  $region22: #{simple_timesnet_forward.1} parent=0 // pred_check
    _
  $region23: #{simple_timesnet_forward.1} parent=0 // pred_check_branch
    %22 = sbr.rel (0) target = $region25
  $region24: #{simple_timesnet_forward.1} parent=0 // pred_region
    _
  $region25: #{simple_timesnet_forward.1} parent=0 // pred_fallthru
    _
  %v23 = vld [vmem:[%s0] sm:$0xff]
  %v24 = vld [vmem:[%s0 + $0x8] sm:$0xff]
  %v25 = vld [vmem:[%s0 + $0x10] sm:$0xff]
  %v26 = vld [vmem:[%s0 + $0x18] sm:$0xff]
  %v27 = vld [vmem:[%s0 + $0x20] sm:$0xff]
  %v28 = vld [vmem:[%s0 + $0x28] sm:$0xff]
  %v29 = vld [vmem:[%s0 + $0x30] sm:$0xff]
  %v30 = vld [vmem:[%s0 + $0x38] sm:$0xff]
  %v31 = vld [vmem:[%s0 + $0x40] sm:$0xff]
  %v32 = vld [vmem:[%s0 + $0x48] sm:$0xff]
  %v33 = vld [vmem:[%s0 + $0x50] sm:$0xff]
  %v34 = vld [vmem:[%s0 + $0x58] sm:$0xff]
  %v35 = vlaneseq
  %v36 = vshrl.u32 %v35, 7
  %v37 = vadd.s32 %v36, 8
  %v38 = vadd.s32 %v36, 16
  %v39 = vadd.s32 %v36, 24
  %v40 = vadd.s32 %v36, 32
  %v41 = vadd.s32 %v36, 40
  %vm42 = vcmp.eq.s32.totalorder %v36, 0
  %vm43 = vcmp.eq.s32.totalorder %v37, 0
  %vm44 = vcmp.eq.s32.totalorder %v38, 0
  %vm45 = vcmp.eq.s32.totalorder %v39, 0
  %vm46 = vcmp.eq.s32.totalorder %v40, 0
  %vm47 = vcmp.eq.s32.totalorder %v41, 0
  %v48 = vrot.slane %v23, 7
  %v49 = vrot.slane %v24, 7
  %v50 = vrot.slane %v25, 7
  %v51 = vrot.slane %v26, 7
  %v52 = vrot.slane %v27, 7
  %v53 = vrot.slane %v28, 7
  %v54 = vrot.slane %v29, 7
  %v55 = vrot.slane %v30, 7
  %v56 = vrot.slane %v31, 7
  %v57 = vrot.slane %v32, 7
  %v58 = vrot.slane %v33, 7
  %v59 = vrot.slane %v34, 7
  %vm60 = vcmp.lt.s32.totalorder %v36, 1
  %v61 = vsel %vm60, %v58, %v59
  %v62 = vsel %vm60, %v57, %v58
  %v63 = vsel %vm60, %v56, %v57
  %v64 = vsel %vm60, %v55, %v56
  %v65 = vsel %vm60, %v54, %v55
  %v66 = vsel %vm60, %v53, %v54
  %v67 = vsel %vm60, %v52, %v53
  %v68 = vsel %vm60, %v51, %v52
  %v69 = vsel %vm60, %v50, %v51
  %v70 = vsel %vm60, %v49, %v50
  %v71 = vsel %vm60, %v48, %v49
  %v72 = vsel %vm60, %v59, %v48
  %v73 = vsel %vm42, 0.0, %v72
  %v74 = vsel %vm43, 0.0, %v71
  %v75 = vsel %vm44, 0.0, %v70
  %v76 = vsel %vm45, 0.0, %v69
  %v77 = vsel %vm46, 0.0, %v68
  %v78 = vsel %vm47, 0.0, %v67
  %v79 = vsel %vm42, 0.0, %v66
  %v80 = vsel %vm43, 0.0, %v65
  %v81 = vsel %vm44, 0.0, %v64
  %v82 = vsel %vm45, 0.0, %v63
  %v83 = vsel %vm46, 0.0, %v62
  %v84 = vsel %vm47, 0.0, %v61
  %vm85 = vcmp.eq.s32.totalorder %v36, 47
  %vm86 = vcmp.eq.s32.totalorder %v37, 47
  %vm87 = vcmp.eq.s32.totalorder %v38, 47
  %vm88 = vcmp.eq.s32.totalorder %v39, 47
  %vm89 = vcmp.eq.s32.totalorder %v40, 47
  %vm90 = vcmp.eq.s32.totalorder %v41, 47
  %v91 = vrot.slane %v23, 1
  %v92 = vrot.slane %v24, 1
  %v93 = vrot.slane %v25, 1
  %v94 = vrot.slane %v26, 1
  %v95 = vrot.slane %v27, 1
  %v96 = vrot.slane %v28, 1
  %v97 = vrot.slane %v29, 1
  %v98 = vrot.slane %v30, 1
  %v99 = vrot.slane %v31, 1
  %v100 = vrot.slane %v32, 1
  %v101 = vrot.slane %v33, 1
  %v102 = vrot.slane %v34, 1
  %vm103 = vcmp.lt.s32.totalorder %v36, 7
  %v104 = vsel %vm103, %v101, %v102
  %v105 = vsel %vm103, %v100, %v101
  %v106 = vsel %vm103, %v99, %v100
  %v107 = vsel %vm103, %v98, %v99
  %v108 = vsel %vm103, %v97, %v98
  %v109 = vsel %vm103, %v96, %v97
  %v110 = vsel %vm103, %v95, %v96
  %v111 = vsel %vm103, %v94, %v95
  %v112 = vsel %vm103, %v93, %v94
  %v113 = vsel %vm103, %v92, %v93
  %v114 = vsel %vm103, %v91, %v92
  %v115 = vsel %vm103, %v102, %v91
  %v116 = vsel %vm85, 0.0, %v114
  %v117 = vsel %vm86, 0.0, %v113
  %v118 = vsel %vm87, 0.0, %v112
  %v119 = vsel %vm88, 0.0, %v111
  %v120 = vsel %vm89, 0.0, %v110
  %v121 = vsel %vm90, 0.0, %v109
  %v122 = vsel %vm85, 0.0, %v108
  %v123 = vsel %vm86, 0.0, %v107
  %v124 = vsel %vm87, 0.0, %v106
  %v125 = vsel %vm88, 0.0, %v105
  %v126 = vsel %vm89, 0.0, %v104
  %v127 = vsel %vm90, 0.0, %v115
  %v128 = vld [vmem:[%s1] sm:$0xf]
  %s129 = scalar_lea.vmem %s1, 4
  %v130 = vld [vmem:[%s129] sm:$0xf]
  %vm131 = vcmask 31744
  %v133 = vsel %vm131, %v23, 0
  %v136 = vsel %vm131, %v24, 0
  %v139 = vsel %vm131, %v25, 0
  %v142 = vsel %vm131, %v26, 0
  %v145 = vsel %vm131, %v27, 0
  %v148 = vsel %vm131, %v28, 0
  %v151 = vsel %vm131, %v29, 0
  %v154 = vsel %vm131, %v30, 0
  %v157 = vsel %vm131, %v31, 0
  %v160 = vsel %vm131, %v32, 0
  %v163 = vsel %vm131, %v33, 0
  %v166 = vsel %vm131, %v34, 0
  %vm168 = vcmask 1043456
  %v170 = vsel %vm168, %v130, 0
  %172 = vmatprep.subr.mxu0 0.0
  %173 = vmatpush1.msra.mxu0 %v170
  %174 = vmatprep.subr.mxu0 0.0
  %175 = vmatpush1.msra.mxu0 0.0
  %176 = vmatprep.subr.mxu0 0.0
  %177 = vmatpush1.msra.mxu0 0.0
  %178 = vmatprep.subr.mxu0 0.0
  %179 = vmatpush1.msra.mxu0 0.0
  %180 = vmatprep.subr.mxu0 0.0
  %181 = vmatpush1.msra.mxu0 0.0
  %182 = vmatprep.subr.mxu0 0.0
  %183 = vmatpush1.msra.mxu0 0.0
  %184 = vmatprep.subr.mxu0 0.0
  %185 = vmatpush1.msra.mxu0 0.0
  %186 = vmatprep.subr.mxu0 0.0
  %187 = vmatpush1.msra.mxu0 0.0
  %188 = vmatprep.subr.mxu0 0.0
  %189 = vmatpush1.msra.mxu0 0.0
  %190 = vmatprep.subr.mxu0 0.0
  %191 = vmatpush1.msra.mxu0 0.0
  %192 = vmatprep.subr.mxu0 0.0
  %193 = vmatpush1.msra.mxu0 0.0
  %194 = vmatprep.subr.mxu0 0.0
  %195 = vmatpush1.msra.mxu0 0.0
  %196 = vmatprep.subr.mxu0 0.0
  %197 = vmatpush1.msra.mxu0 0.0
  %198 = vmatprep.subr.mxu0 0.0
  %199 = vmatpush1.msra.mxu0 0.0
  %200 = vmatprep.subr.mxu0 0.0
  %201 = vmatpush1.msra.mxu0 0.0
  %202 = vmatprep.subr.mxu0 0.0
  %203 = vmatpush1.msra.mxu0 0.0
  %204 = vmatprep.subr.mxu0 0.0
  %205 = vmatpush1.msra.mxu0 0.0
  %206 = vmatprep.subr.mxu0 0.0
  %207 = vmatpush1.msra.mxu0 0.0
  %208 = vmatprep.subr.mxu0 0.0
  %209 = vmatpush1.msra.mxu0 0.0
  %210 = vmatprep.subr.mxu0 0.0
  %211 = vmatpush1.msra.mxu0 0.0
  %212 = vmatprep.subr.mxu0 0.0
  %213 = vmatpush1.msra.mxu0 0.0
  %214 = vmatprep.subr.mxu0 0.0
  %215 = vmatpush1.msra.mxu0 0.0
  %216 = vmatprep.subr.mxu0 0.0
  %217 = vmatpush1.msra.mxu0 0.0
  %218 = vmatprep.subr.mxu0 0.0
  %219 = vmatpush1.msra.mxu0 0.0
  %220 = vmatprep.subr.mxu0 0.0
  %221 = vmatpush1.msra.mxu0 0.0
  %222 = vmatprep.subr.mxu0 0.0
  %223 = vmatpush1.msra.mxu0 0.0
  %224 = vmatprep.subr.mxu0 0.0
  %225 = vmatpush1.msra.mxu0 0.0
  %226 = vmatprep.subr.mxu0 0.0
  %227 = vmatpush1.msra.mxu0 0.0
  %228 = vmatprep.subr.mxu0 0.0
  %229 = vmatpush1.msra.mxu0 0.0
  %230 = vmatprep.subr.mxu0 0.0
  %231 = vmatpush1.msra.mxu0 0.0
  %232 = vmatprep.subr.mxu0 0.0
  %233 = vmatpush1.msra.mxu0 0.0
  %234 = vmatprep.subr.mxu0 0.0
  %235 = vmatpush1.msra.mxu0 0.0
  %236 = vmatprep.mubr.f32.mxu0 0.0
  %237 = vmatmul.mubr.f32.gmra.mrb[0].mxu0 %v133
  %v238 = vpop.f32.mrb[0].mxu0
  %v239 = vadd.f32 0.0, %v238
  %v240 = vpop.f32.mrb[0].mxu0
  %241 = vmatprep.mubr.f32.mxu0 0.0
  %242 = vmatmul.mubr.f32.gmra.mrb[0].mxu0 %v136
  %v243 = vpop.f32.mrb[0].mxu0
  %v244 = vadd.f32 0.0, %v243
  %v245 = vpop.f32.mrb[0].mxu0
  %246 = vmatprep.mubr.f32.mxu0 0.0
  %247 = vmatmul.mubr.f32.gmra.mrb[0].mxu0 %v139
  %v248 = vpop.f32.mrb[0].mxu0
  %v249 = vadd.f32 0.0, %v248
  %v250 = vpop.f32.mrb[0].mxu0
  %251 = vmatprep.mubr.f32.mxu0 0.0
  %252 = vmatmul.mubr.f32.gmra.mrb[0].mxu0 %v142
  %v253 = vpop.f32.mrb[0].mxu0
  %v254 = vadd.f32 0.0, %v253
  %v255 = vpop.f32.mrb[0].mxu0
  %256 = vmatprep.mubr.f32.mxu0 0.0
  %257 = vmatmul.mubr.f32.gmra.mrb[0].mxu0 %v145
  %v258 = vpop.f32.mrb[0].mxu0
  %v259 = vadd.f32 0.0, %v258
  %v260 = vpop.f32.mrb[0].mxu0
  %261 = vmatprep.mubr.f32.mxu0 0.0
  %262 = vmatmul.mubr.f32.gmra.mrb[0].mxu0 %v148
  %v263 = vpop.f32.mrb[0].mxu0
  %v264 = vadd.f32 0.0, %v263
  %v265 = vpop.f32.mrb[0].mxu0
  %266 = vmatprep.mubr.f32.mxu0 0.0
  %267 = vmatmul.mubr.f32.gmra.mrb[0].mxu0 %v151
  %v268 = vpop.f32.mrb[0].mxu0
  %v269 = vadd.f32 0.0, %v268
  %v270 = vpop.f32.mrb[0].mxu0
  %271 = vmatprep.mubr.f32.mxu0 0.0
  %272 = vmatmul.mubr.f32.gmra.mrb[0].mxu0 %v154
  %v273 = vpop.f32.mrb[0].mxu0
  %v274 = vadd.f32 0.0, %v273
  %v275 = vpop.f32.mrb[0].mxu0
  %276 = vmatprep.mubr.f32.mxu0 0.0
  %277 = vmatmul.mubr.f32.gmra.mrb[0].mxu0 %v157
  %v278 = vpop.f32.mrb[0].mxu0
  %v279 = vadd.f32 0.0, %v278
  %v280 = vpop.f32.mrb[0].mxu0
  %281 = vmatprep.mubr.f32.mxu0 0.0
  %282 = vmatmul.mubr.f32.gmra.mrb[0].mxu0 %v160
  %v283 = vpop.f32.mrb[0].mxu0
  %v284 = vadd.f32 0.0, %v283
  %v285 = vpop.f32.mrb[0].mxu0
  %286 = vmatprep.mubr.f32.mxu0 0.0
  %287 = vmatmul.mubr.f32.gmra.mrb[0].mxu0 %v163
  %v288 = vpop.f32.mrb[0].mxu0
  %v289 = vadd.f32 0.0, %v288
  %v290 = vpop.f32.mrb[0].mxu0
  %291 = vmatprep.mubr.f32.mxu0 0.0
  %292 = vmatmul.mubr.f32.gmra.mrb[0].mxu0 %v166
  %v293 = vpop.f32.mrb[0].mxu0
  %v294 = vadd.f32 0.0, %v293
  %v295 = vpop.f32.mrb[0].mxu0
  %296 = vdwg.mxu0
  %v298 = vsel %vm131, %v73, 0
  %v301 = vsel %vm131, %v74, 0
  %v304 = vsel %vm131, %v75, 0
  %v307 = vsel %vm131, %v76, 0
  %v310 = vsel %vm131, %v77, 0
  %v313 = vsel %vm131, %v78, 0
  %v316 = vsel %vm131, %v79, 0
  %v319 = vsel %vm131, %v80, 0
  %v322 = vsel %vm131, %v81, 0
  %v325 = vsel %vm131, %v82, 0
  %v328 = vsel %vm131, %v83, 0
  %v331 = vsel %vm131, %v84, 0
  %v334 = vsel %vm168, %v128, 0
  %336 = vmatprep.subr.mxu0 0.0
  %337 = vmatpush1.msra.mxu0 %v334
  %338 = vmatprep.subr.mxu0 0.0
  %339 = vmatpush1.msra.mxu0 0.0
  %340 = vmatprep.subr.mxu0 0.0
  %341 = vmatpush1.msra.mxu0 0.0
  %342 = vmatprep.subr.mxu0 0.0
  %343 = vmatpush1.msra.mxu0 0.0
  %344 = vmatprep.subr.mxu0 0.0
  %345 = vmatpush1.msra.mxu0 0.0
  %346 = vmatprep.subr.mxu0 0.0
  %347 = vmatpush1.msra.mxu0 0.0
  %348 = vmatprep.subr.mxu0 0.0
  %349 = vmatpush1.msra.mxu0 0.0
  %350 = vmatprep.subr.mxu0 0.0
  %351 = vmatpush1.msra.mxu0 0.0
  %352 = vmatprep.subr.mxu0 0.0
  %353 = vmatpush1.msra.mxu0 0.0
  %354 = vmatprep.subr.mxu0 0.0
  %355 = vmatpush1.msra.mxu0 0.0
  %356 = vmatprep.subr.mxu0 0.0
  %357 = vmatpush1.msra.mxu0 0.0
  %358 = vmatprep.subr.mxu0 0.0
  %359 = vmatpush1.msra.mxu0 0.0
  %360 = vmatprep.subr.mxu0 0.0
  %361 = vmatpush1.msra.mxu0 0.0
  %362 = vmatprep.subr.mxu0 0.0
  %363 = vmatpush1.msra.mxu0 0.0
  %364 = vmatprep.subr.mxu0 0.0
  %365 = vmatpush1.msra.mxu0 0.0
  %366 = vmatprep.subr.mxu0 0.0
  %367 = vmatpush1.msra.mxu0 0.0
  %368 = vmatprep.subr.mxu0 0.0
  %369 = vmatpush1.msra.mxu0 0.0
  %370 = vmatprep.subr.mxu0 0.0
  %371 = vmatpush1.msra.mxu0 0.0
  %372 = vmatprep.subr.mxu0 0.0
  %373 = vmatpush1.msra.mxu0 0.0
  %374 = vmatprep.subr.mxu0 0.0
  %375 = vmatpush1.msra.mxu0 0.0
  %376 = vmatprep.subr.mxu0 0.0
  %377 = vmatpush1.msra.mxu0 0.0
  %378 = vmatprep.subr.mxu0 0.0
  %379 = vmatpush1.msra.mxu0 0.0
  %380 = vmatprep.subr.mxu0 0.0
  %381 = vmatpush1.msra.mxu0 0.0
  %382 = vmatprep.subr.mxu0 0.0
  %383 = vmatpush1.msra.mxu0 0.0
  %384 = vmatprep.subr.mxu0 0.0
  %385 = vmatpush1.msra.mxu0 0.0
  %386 = vmatprep.subr.mxu0 0.0
  %387 = vmatpush1.msra.mxu0 0.0
  %388 = vmatprep.subr.mxu0 0.0
  %389 = vmatpush1.msra.mxu0 0.0
  %390 = vmatprep.subr.mxu0 0.0
  %391 = vmatpush1.msra.mxu0 0.0
  %392 = vmatprep.subr.mxu0 0.0
  %393 = vmatpush1.msra.mxu0 0.0
  %394 = vmatprep.subr.mxu0 0.0
  %395 = vmatpush1.msra.mxu0 0.0
  %396 = vmatprep.subr.mxu0 0.0
  %397 = vmatpush1.msra.mxu0 0.0
  %398 = vmatprep.subr.mxu0 0.0
  %399 = vmatpush1.msra.mxu0 0.0
  %400 = vmatprep.mubr.f32.mxu0 0.0
  %401 = vmatmul.mubr.f32.gmra.mrb[0].mxu0 %v298
  %v402 = vpop.f32.mrb[0].mxu0
  %v403 = vadd.f32 %v239, %v402
  %v404 = vpop.f32.mrb[0].mxu0
  %405 = vmatprep.mubr.f32.mxu0 0.0
  %406 = vmatmul.mubr.f32.gmra.mrb[0].mxu0 %v301
  %v407 = vpop.f32.mrb[0].mxu0
  %v408 = vadd.f32 %v244, %v407
  %v409 = vpop.f32.mrb[0].mxu0
  %410 = vmatprep.mubr.f32.mxu0 0.0
  %411 = vmatmul.mubr.f32.gmra.mrb[0].mxu0 %v304
  %v412 = vpop.f32.mrb[0].mxu0
  %v413 = vadd.f32 %v249, %v412
  %v414 = vpop.f32.mrb[0].mxu0
  %415 = vmatprep.mubr.f32.mxu0 0.0
  %416 = vmatmul.mubr.f32.gmra.mrb[0].mxu0 %v307
  %v417 = vpop.f32.mrb[0].mxu0
  %v418 = vadd.f32 %v254, %v417
  %v419 = vpop.f32.mrb[0].mxu0
  %420 = vmatprep.mubr.f32.mxu0 0.0
  %421 = vmatmul.mubr.f32.gmra.mrb[0].mxu0 %v310
  %v422 = vpop.f32.mrb[0].mxu0
  %v423 = vadd.f32 %v259, %v422
  %v424 = vpop.f32.mrb[0].mxu0
  %425 = vmatprep.mubr.f32.mxu0 0.0
  %426 = vmatmul.mubr.f32.gmra.mrb[0].mxu0 %v313
  %v427 = vpop.f32.mrb[0].mxu0
  %v428 = vadd.f32 %v264, %v427
  %v429 = vpop.f32.mrb[0].mxu0
  %430 = vmatprep.mubr.f32.mxu0 0.0
  %431 = vmatmul.mubr.f32.gmra.mrb[0].mxu0 %v316
  %v432 = vpop.f32.mrb[0].mxu0
  %v433 = vadd.f32 %v269, %v432
  %v434 = vpop.f32.mrb[0].mxu0
  %435 = vmatprep.mubr.f32.mxu0 0.0
  %436 = vmatmul.mubr.f32.gmra.mrb[0].mxu0 %v319
  %v437 = vpop.f32.mrb[0].mxu0
  %v438 = vadd.f32 %v274, %v437
  %v439 = vpop.f32.mrb[0].mxu0
  %440 = vmatprep.mubr.f32.mxu0 0.0
  %441 = vmatmul.mubr.f32.gmra.mrb[0].mxu0 %v322
  %v442 = vpop.f32.mrb[0].mxu0
  %v443 = vadd.f32 %v279, %v442
  %v444 = vpop.f32.mrb[0].mxu0
  %445 = vmatprep.mubr.f32.mxu0 0.0
  %446 = vmatmul.mubr.f32.gmra.mrb[0].mxu0 %v325
  %v447 = vpop.f32.mrb[0].mxu0
  %v448 = vadd.f32 %v284, %v447
  %v449 = vpop.f32.mrb[0].mxu0
  %450 = vmatprep.mubr.f32.mxu0 0.0
  %451 = vmatmul.mubr.f32.gmra.mrb[0].mxu0 %v328
  %v452 = vpop.f32.mrb[0].mxu0
  %v453 = vadd.f32 %v289, %v452
  %v454 = vpop.f32.mrb[0].mxu0
  %455 = vmatprep.mubr.f32.mxu0 0.0
  %456 = vmatmul.mubr.f32.gmra.mrb[0].mxu0 %v331
  %v457 = vpop.f32.mrb[0].mxu0
  %v458 = vadd.f32 %v294, %v457
  %v459 = vpop.f32.mrb[0].mxu0
  %460 = vdwg.mxu0
  %s461 = scalar_lea.vmem %s1, 8
  %v462 = vld [vmem:[%s461] sm:$0xf]
  %v464 = vsel %vm131, %v116, 0
  %v467 = vsel %vm131, %v117, 0
  %v470 = vsel %vm131, %v118, 0
  %v473 = vsel %vm131, %v119, 0
  %v476 = vsel %vm131, %v120, 0
  %v479 = vsel %vm131, %v121, 0
  %v482 = vsel %vm131, %v122, 0
  %v485 = vsel %vm131, %v123, 0
  %v488 = vsel %vm131, %v124, 0
  %v491 = vsel %vm131, %v125, 0
  %v494 = vsel %vm131, %v126, 0
  %v497 = vsel %vm131, %v127, 0
  %v500 = vsel %vm168, %v462, 0
  %502 = vmatprep.subr.mxu0 0.0
  %503 = vmatpush1.msra.mxu0 %v500
  %504 = vmatprep.subr.mxu0 0.0
  %505 = vmatpush1.msra.mxu0 0.0
  %506 = vmatprep.subr.mxu0 0.0
  %507 = vmatpush1.msra.mxu0 0.0
  %508 = vmatprep.subr.mxu0 0.0
  %509 = vmatpush1.msra.mxu0 0.0
  %510 = vmatprep.subr.mxu0 0.0
  %511 = vmatpush1.msra.mxu0 0.0
  %512 = vmatprep.subr.mxu0 0.0
  %513 = vmatpush1.msra.mxu0 0.0
  %514 = vmatprep.subr.mxu0 0.0
  %515 = vmatpush1.msra.mxu0 0.0
  %516 = vmatprep.subr.mxu0 0.0
  %517 = vmatpush1.msra.mxu0 0.0
  %518 = vmatprep.subr.mxu0 0.0
  %519 = vmatpush1.msra.mxu0 0.0
  %520 = vmatprep.subr.mxu0 0.0
  %521 = vmatpush1.msra.mxu0 0.0
  %522 = vmatprep.subr.mxu0 0.0
  %523 = vmatpush1.msra.mxu0 0.0
  %524 = vmatprep.subr.mxu0 0.0
  %525 = vmatpush1.msra.mxu0 0.0
  %526 = vmatprep.subr.mxu0 0.0
  %527 = vmatpush1.msra.mxu0 0.0
  %528 = vmatprep.subr.mxu0 0.0
  %529 = vmatpush1.msra.mxu0 0.0
  %530 = vmatprep.subr.mxu0 0.0
  %531 = vmatpush1.msra.mxu0 0.0
  %532 = vmatprep.subr.mxu0 0.0
  %533 = vmatpush1.msra.mxu0 0.0
  %534 = vmatprep.subr.mxu0 0.0
  %535 = vmatpush1.msra.mxu0 0.0
  %536 = vmatprep.subr.mxu0 0.0
  %537 = vmatpush1.msra.mxu0 0.0
  %538 = vmatprep.subr.mxu0 0.0
  %539 = vmatpush1.msra.mxu0 0.0
  %540 = vmatprep.subr.mxu0 0.0
  %541 = vmatpush1.msra.mxu0 0.0
  %542 = vmatprep.subr.mxu0 0.0
  %543 = vmatpush1.msra.mxu0 0.0
  %544 = vmatprep.subr.mxu0 0.0
  %545 = vmatpush1.msra.mxu0 0.0
  %546 = vmatprep.subr.mxu0 0.0
  %547 = vmatpush1.msra.mxu0 0.0
  %548 = vmatprep.subr.mxu0 0.0
  %549 = vmatpush1.msra.mxu0 0.0
  %550 = vmatprep.subr.mxu0 0.0
  %551 = vmatpush1.msra.mxu0 0.0
  %552 = vmatprep.subr.mxu0 0.0
  %553 = vmatpush1.msra.mxu0 0.0
  %554 = vmatprep.subr.mxu0 0.0
  %555 = vmatpush1.msra.mxu0 0.0
  %556 = vmatprep.subr.mxu0 0.0
  %557 = vmatpush1.msra.mxu0 0.0
  %558 = vmatprep.subr.mxu0 0.0
  %559 = vmatpush1.msra.mxu0 0.0
  %560 = vmatprep.subr.mxu0 0.0
  %561 = vmatpush1.msra.mxu0 0.0
  %562 = vmatprep.subr.mxu0 0.0
  %563 = vmatpush1.msra.mxu0 0.0
  %564 = vmatprep.subr.mxu0 0.0
  %565 = vmatpush1.msra.mxu0 0.0
  %566 = vmatprep.mubr.f32.mxu0 0.0
  %567 = vmatmul.mubr.f32.gmra.mrb[0].mxu0 %v464
  %v568 = vpop.f32.mrb[0].mxu0
  %v569 = vadd.f32 0.0, %v568
  %v570 = vpop.f32.mrb[0].mxu0
  %571 = vmatprep.mubr.f32.mxu0 0.0
  %572 = vmatmul.mubr.f32.gmra.mrb[0].mxu0 %v467
  %v573 = vpop.f32.mrb[0].mxu0
  %v574 = vadd.f32 0.0, %v573
  %v575 = vpop.f32.mrb[0].mxu0
  %576 = vmatprep.mubr.f32.mxu0 0.0
  %577 = vmatmul.mubr.f32.gmra.mrb[0].mxu0 %v470
  %v578 = vpop.f32.mrb[0].mxu0
  %v579 = vadd.f32 0.0, %v578
  %v580 = vpop.f32.mrb[0].mxu0
  %581 = vmatprep.mubr.f32.mxu0 0.0
  %582 = vmatmul.mubr.f32.gmra.mrb[0].mxu0 %v473
  %v583 = vpop.f32.mrb[0].mxu0
  %v584 = vadd.f32 0.0, %v583
  %v585 = vpop.f32.mrb[0].mxu0
  %586 = vmatprep.mubr.f32.mxu0 0.0
  %587 = vmatmul.mubr.f32.gmra.mrb[0].mxu0 %v476
  %v588 = vpop.f32.mrb[0].mxu0
  %v589 = vadd.f32 0.0, %v588
  %v590 = vpop.f32.mrb[0].mxu0
  %591 = vmatprep.mubr.f32.mxu0 0.0
  %592 = vmatmul.mubr.f32.gmra.mrb[0].mxu0 %v479
  %v593 = vpop.f32.mrb[0].mxu0
  %v594 = vadd.f32 0.0, %v593
  %v595 = vpop.f32.mrb[0].mxu0
  %596 = vmatprep.mubr.f32.mxu0 0.0
  %597 = vmatmul.mubr.f32.gmra.mrb[0].mxu0 %v482
  %v598 = vpop.f32.mrb[0].mxu0
  %v599 = vadd.f32 0.0, %v598
  %v600 = vpop.f32.mrb[0].mxu0
  %601 = vmatprep.mubr.f32.mxu0 0.0
  %602 = vmatmul.mubr.f32.gmra.mrb[0].mxu0 %v485
  %v603 = vpop.f32.mrb[0].mxu0
  %v604 = vadd.f32 0.0, %v603
  %v605 = vpop.f32.mrb[0].mxu0
  %606 = vmatprep.mubr.f32.mxu0 0.0
  %607 = vmatmul.mubr.f32.gmra.mrb[0].mxu0 %v488
  %v608 = vpop.f32.mrb[0].mxu0
  %v609 = vadd.f32 0.0, %v608
  %v610 = vpop.f32.mrb[0].mxu0
  %611 = vmatprep.mubr.f32.mxu0 0.0
  %612 = vmatmul.mubr.f32.gmra.mrb[0].mxu0 %v491
  %v613 = vpop.f32.mrb[0].mxu0
  %v614 = vadd.f32 0.0, %v613
  %v615 = vpop.f32.mrb[0].mxu0
  %616 = vmatprep.mubr.f32.mxu0 0.0
  %617 = vmatmul.mubr.f32.gmra.mrb[0].mxu0 %v494
  %v618 = vpop.f32.mrb[0].mxu0
  %v619 = vadd.f32 0.0, %v618
  %v620 = vpop.f32.mrb[0].mxu0
  %621 = vmatprep.mubr.f32.mxu0 0.0
  %622 = vmatmul.mubr.f32.gmra.mrb[0].mxu0 %v497
  %v623 = vpop.f32.mrb[0].mxu0
  %v624 = vadd.f32 0.0, %v623
  %v625 = vpop.f32.mrb[0].mxu0
  %626 = vdwg.mxu0
  %v627 = vadd.f32 %v403, %v569
  %v628 = vadd.f32 %v408, %v574
  %v629 = vadd.f32 %v413, %v579
  %v630 = vadd.f32 %v418, %v584
  %v631 = vadd.f32 %v423, %v589
  %v632 = vadd.f32 %v428, %v594
  %v633 = vadd.f32 %v433, %v599
  %v634 = vadd.f32 %v438, %v604
  %v635 = vadd.f32 %v443, %v609
  %v636 = vadd.f32 %v448, %v614
  %v637 = vadd.f32 %v453, %v619
  %v638 = vadd.f32 %v458, %v624
  %v639 = vld [vmem:[%s2] sm:$0x1]
  %v641 = vlaneseq
  %v642 = vshrl.u32 %v641, 7
  %v643 = vsub.s32 0, %v642
  %v644 = vrot.slane %v639, %v643
  %v646 = vadd.f32 %v627, %v644
  %v647 = vadd.f32 %v628, %v644
  %v648 = vadd.f32 %v629, %v644
  %v649 = vadd.f32 %v630, %v644
  %v650 = vadd.f32 %v631, %v644
  %v651 = vadd.f32 %v632, %v644
  %v652 = vadd.f32 %v633, %v644
  %v653 = vadd.f32 %v634, %v644
  %v654 = vadd.f32 %v635, %v644
  %v655 = vadd.f32 %v636, %v644
  %v656 = vadd.f32 %v637, %v644
  %v657 = vadd.f32 %v638, %v644
  %v658 = vmax.f32 %v646, 0.0
  %v659 = vmax.f32 %v647, 0.0
  %v660 = vmax.f32 %v648, 0.0
  %v661 = vmax.f32 %v649, 0.0
  %v662 = vmax.f32 %v650, 0.0
  %v663 = vmax.f32 %v651, 0.0
  %v664 = vmax.f32 %v652, 0.0
  %v665 = vmax.f32 %v653, 0.0
  %v666 = vmax.f32 %v654, 0.0
  %v667 = vmax.f32 %v655, 0.0
  %v668 = vmax.f32 %v656, 0.0
  %v669 = vmax.f32 %v657, 0.0
  %v670 = vld [vmem:[%s3] sm:$0xff]
  %v671 = vld [vmem:[%s3 + $0x8] sm:$0xff]
  %v672 = vld [vmem:[%s3 + $0x10] sm:$0xff]
  %vm673 = vcmask 392192
  %v675 = vsel %vm673, %v670, 0
  %v678 = vsel %vm673, %v671, 0
  %v681 = vsel %vm673, %v672, 0
  %683 = vmatprep.subr.mxu0 0.0
  %684 = vmatpush1.msra.mxu0 %v658
  %685 = vmatprep.subr.mxu0 0.0
  %686 = vmatpush1.msra.mxu0 %v659
  %687 = vmatprep.subr.mxu0 0.0
  %688 = vmatpush1.msra.mxu0 %v660
  %689 = vmatprep.subr.mxu0 0.0
  %690 = vmatpush1.msra.mxu0 %v661
  %691 = vmatprep.subr.mxu0 0.0
  %692 = vmatpush1.msra.mxu0 %v662
  %693 = vmatprep.subr.mxu0 0.0
  %694 = vmatpush1.msra.mxu0 %v663
  %695 = vmatprep.subr.mxu0 0.0
  %696 = vmatpush1.msra.mxu0 0.0
  %697 = vmatprep.subr.mxu0 0.0
  %698 = vmatpush1.msra.mxu0 0.0
  %699 = vmatprep.subr.mxu0 0.0
  %700 = vmatpush1.msra.mxu0 0.0
  %701 = vmatprep.subr.mxu0 0.0
  %702 = vmatpush1.msra.mxu0 0.0
  %703 = vmatprep.subr.mxu0 0.0
  %704 = vmatpush1.msra.mxu0 0.0
  %705 = vmatprep.subr.mxu0 0.0
  %706 = vmatpush1.msra.mxu0 0.0
  %707 = vmatprep.subr.mxu0 0.0
  %708 = vmatpush1.msra.mxu0 0.0
  %709 = vmatprep.subr.mxu0 0.0
  %710 = vmatpush1.msra.mxu0 0.0
  %711 = vmatprep.subr.mxu0 0.0
  %712 = vmatpush1.msra.mxu0 0.0
  %713 = vmatprep.subr.mxu0 0.0
  %714 = vmatpush1.msra.mxu0 0.0
  %715 = vmatprep.subr.mxu0 0.0
  %716 = vmatpush1.msra.mxu0 0.0
  %717 = vmatprep.subr.mxu0 0.0
  %718 = vmatpush1.msra.mxu0 0.0
  %719 = vmatprep.subr.mxu0 0.0
  %720 = vmatpush1.msra.mxu0 0.0
  %721 = vmatprep.subr.mxu0 0.0
  %722 = vmatpush1.msra.mxu0 0.0
  %723 = vmatprep.subr.mxu0 0.0
  %724 = vmatpush1.msra.mxu0 0.0
  %725 = vmatprep.subr.mxu0 0.0
  %726 = vmatpush1.msra.mxu0 0.0
  %727 = vmatprep.subr.mxu0 0.0
  %728 = vmatpush1.msra.mxu0 0.0
  %729 = vmatprep.subr.mxu0 0.0
  %730 = vmatpush1.msra.mxu0 0.0
  %731 = vmatprep.subr.mxu0 0.0
  %732 = vmatpush1.msra.mxu0 0.0
  %733 = vmatprep.subr.mxu0 0.0
  %734 = vmatpush1.msra.mxu0 0.0
  %735 = vmatprep.subr.mxu0 0.0
  %736 = vmatpush1.msra.mxu0 0.0
  %737 = vmatprep.subr.mxu0 0.0
  %738 = vmatpush1.msra.mxu0 0.0
  %739 = vmatprep.subr.mxu0 0.0
  %740 = vmatpush1.msra.mxu0 0.0
  %741 = vmatprep.subr.mxu0 0.0
  %742 = vmatpush1.msra.mxu0 0.0
  %743 = vmatprep.subr.mxu0 0.0
  %744 = vmatpush1.msra.mxu0 0.0
  %745 = vmatprep.subr.mxu0 0.0
  %746 = vmatpush1.msra.mxu0 0.0
  %747 = vmatprep.mubr.f32.mxu0 0.0
  %748 = vmatmul.mubr.f32.gmra.mrb[0].mxu0 %v675
  %v749 = vpop.f32.mrb[0].mxu0
  %v750 = vadd.f32 0.0, %v749
  %v751 = vpop.f32.mrb[0].mxu0
  %752 = vmatprep.mubr.f32.mxu0 0.0
  %753 = vmatmul.mubr.f32.gmra.mrb[0].mxu0 %v678
  %v754 = vpop.f32.mrb[0].mxu0
  %v755 = vadd.f32 0.0, %v754
  %v756 = vpop.f32.mrb[0].mxu0
  %757 = vmatprep.mubr.f32.mxu0 0.0
  %758 = vmatmul.mubr.f32.gmra.mrb[0].mxu0 %v681
  %v759 = vpop.f32.mrb[0].mxu0
  %v760 = vadd.f32 0.0, %v759
  %v761 = vpop.f32.mrb[0].mxu0
  %762 = vdwg.mxu0
  %763 = vmatprep.subr.mxu0 0.0
  %764 = vmatpush1.msra.mxu0 %v664
  %765 = vmatprep.subr.mxu0 0.0
  %766 = vmatpush1.msra.mxu0 %v665
  %767 = vmatprep.subr.mxu0 0.0
  %768 = vmatpush1.msra.mxu0 %v666
  %769 = vmatprep.subr.mxu0 0.0
  %770 = vmatpush1.msra.mxu0 %v667
  %771 = vmatprep.subr.mxu0 0.0
  %772 = vmatpush1.msra.mxu0 %v668
  %773 = vmatprep.subr.mxu0 0.0
  %774 = vmatpush1.msra.mxu0 %v669
  %775 = vmatprep.subr.mxu0 0.0
  %776 = vmatpush1.msra.mxu0 0.0
  %777 = vmatprep.subr.mxu0 0.0
  %778 = vmatpush1.msra.mxu0 0.0
  %779 = vmatprep.subr.mxu0 0.0
  %780 = vmatpush1.msra.mxu0 0.0
  %781 = vmatprep.subr.mxu0 0.0
  %782 = vmatpush1.msra.mxu0 0.0
  %783 = vmatprep.subr.mxu0 0.0
  %784 = vmatpush1.msra.mxu0 0.0
  %785 = vmatprep.subr.mxu0 0.0
  %786 = vmatpush1.msra.mxu0 0.0
  %787 = vmatprep.subr.mxu0 0.0
  %788 = vmatpush1.msra.mxu0 0.0
  %789 = vmatprep.subr.mxu0 0.0
  %790 = vmatpush1.msra.mxu0 0.0
  %791 = vmatprep.subr.mxu0 0.0
  %792 = vmatpush1.msra.mxu0 0.0
  %793 = vmatprep.subr.mxu0 0.0
  %794 = vmatpush1.msra.mxu0 0.0
  %795 = vmatprep.subr.mxu0 0.0
  %796 = vmatpush1.msra.mxu0 0.0
  %797 = vmatprep.subr.mxu0 0.0
  %798 = vmatpush1.msra.mxu0 0.0
  %799 = vmatprep.subr.mxu0 0.0
  %800 = vmatpush1.msra.mxu0 0.0
  %801 = vmatprep.subr.mxu0 0.0
  %802 = vmatpush1.msra.mxu0 0.0
  %803 = vmatprep.subr.mxu0 0.0
  %804 = vmatpush1.msra.mxu0 0.0
  %805 = vmatprep.subr.mxu0 0.0
  %806 = vmatpush1.msra.mxu0 0.0
  %807 = vmatprep.subr.mxu0 0.0
  %808 = vmatpush1.msra.mxu0 0.0
  %809 = vmatprep.subr.mxu0 0.0
  %810 = vmatpush1.msra.mxu0 0.0
  %811 = vmatprep.subr.mxu0 0.0
  %812 = vmatpush1.msra.mxu0 0.0
  %813 = vmatprep.subr.mxu0 0.0
  %814 = vmatpush1.msra.mxu0 0.0
  %815 = vmatprep.subr.mxu0 0.0
  %816 = vmatpush1.msra.mxu0 0.0
  %817 = vmatprep.subr.mxu0 0.0
  %818 = vmatpush1.msra.mxu0 0.0
  %819 = vmatprep.subr.mxu0 0.0
  %820 = vmatpush1.msra.mxu0 0.0
  %821 = vmatprep.subr.mxu0 0.0
  %822 = vmatpush1.msra.mxu0 0.0
  %823 = vmatprep.subr.mxu0 0.0
  %824 = vmatpush1.msra.mxu0 0.0
  %825 = vmatprep.subr.mxu0 0.0
  %826 = vmatpush1.msra.mxu0 0.0
  %827 = vmatprep.mubr.f32.mxu0 0.0
  %828 = vmatmul.mubr.f32.gmra.mrb[0].mxu0 %v675
  %v829 = vpop.f32.mrb[0].mxu0
  %v830 = vadd.f32 0.0, %v829
  %v831 = vpop.f32.mrb[0].mxu0
  %832 = vmatprep.mubr.f32.mxu0 0.0
  %833 = vmatmul.mubr.f32.gmra.mrb[0].mxu0 %v678
  %v834 = vpop.f32.mrb[0].mxu0
  %v835 = vadd.f32 0.0, %v834
  %v836 = vpop.f32.mrb[0].mxu0
  %837 = vmatprep.mubr.f32.mxu0 0.0
  %838 = vmatmul.mubr.f32.gmra.mrb[0].mxu0 %v681
  %v839 = vpop.f32.mrb[0].mxu0
  %v840 = vadd.f32 0.0, %v839
  %v841 = vpop.f32.mrb[0].mxu0
  %842 = vdwg.mxu0
  %v843 = vld [vmem:[%s4] sm:$0xff]
  %v844 = vld [vmem:[%s4 + $0x8] sm:$0xff]
  %v845 = vld [vmem:[%s4 + $0x10] sm:$0xff]
  %v846 = vld [vmem:[%s4 + $0x18] sm:$0xff]
  %v847 = vld [vmem:[%s4 + $0x20] sm:$0xff]
  %v848 = vld [vmem:[%s4 + $0x28] sm:$0xff]
  %v849 = vld [vmem:[%s4 + $0x30] sm:$0xff]
  %v850 = vld [vmem:[%s4 + $0x38] sm:$0xff]
  %v851 = vld [vmem:[%s5] sm:$0x1]
  %v853 = vlaneseq
  %v854 = vshrl.u32 %v853, 7
  %v855 = vsub.s32 0, %v854
  %v856 = vrot.slane %v851, %v855
  %vm858 = vcmask 523264
  %v860 = vsel %vm858, %v750, 0
  %v863 = vsel %vm858, %v755, 0
  %v866 = vsel %vm858, %v760, 0
  %v869 = vsel %vm858, %v830, 0
  %v872 = vsel %vm858, %v835, 0
  %v875 = vsel %vm858, %v840, 0
  %877 = vmatprep.subr.mxu0 0.0
  %878 = vmatpush1.msra.mxu0 %v843
  %879 = vmatprep.subr.mxu0 0.0
  %880 = vmatpush1.msra.mxu0 %v844
  %881 = vmatprep.subr.mxu0 0.0
  %882 = vmatpush1.msra.mxu0 %v845
  %883 = vmatprep.subr.mxu0 0.0
  %884 = vmatpush1.msra.mxu0 %v846
  %885 = vmatprep.subr.mxu0 0.0
  %886 = vmatpush1.msra.mxu0 %v847
  %887 = vmatprep.subr.mxu0 0.0
  %888 = vmatpush1.msra.mxu0 %v848
  %889 = vmatprep.subr.mxu0 0.0
  %890 = vmatpush1.msra.mxu0 %v849
  %891 = vmatprep.subr.mxu0 0.0
  %892 = vmatpush1.msra.mxu0 %v850
  %893 = vmatprep.subr.mxu0 0.0
  %894 = vmatpush1.msra.mxu0 0.0
  %895 = vmatprep.subr.mxu0 0.0
  %896 = vmatpush1.msra.mxu0 0.0
  %897 = vmatprep.subr.mxu0 0.0
  %898 = vmatpush1.msra.mxu0 0.0
  %899 = vmatprep.subr.mxu0 0.0
  %900 = vmatpush1.msra.mxu0 0.0
  %901 = vmatprep.subr.mxu0 0.0
  %902 = vmatpush1.msra.mxu0 0.0
  %903 = vmatprep.subr.mxu0 0.0
  %904 = vmatpush1.msra.mxu0 0.0
  %905 = vmatprep.subr.mxu0 0.0
  %906 = vmatpush1.msra.mxu0 0.0
  %907 = vmatprep.subr.mxu0 0.0
  %908 = vmatpush1.msra.mxu0 0.0
  %909 = vmatprep.subr.mxu0 0.0
  %910 = vmatpush1.msra.mxu0 0.0
  %911 = vmatprep.subr.mxu0 0.0
  %912 = vmatpush1.msra.mxu0 0.0
  %913 = vmatprep.subr.mxu0 0.0
  %914 = vmatpush1.msra.mxu0 0.0
  %915 = vmatprep.subr.mxu0 0.0
  %916 = vmatpush1.msra.mxu0 0.0
  %917 = vmatprep.subr.mxu0 0.0
  %918 = vmatpush1.msra.mxu0 0.0
  %919 = vmatprep.subr.mxu0 0.0
  %920 = vmatpush1.msra.mxu0 0.0
  %921 = vmatprep.subr.mxu0 0.0
  %922 = vmatpush1.msra.mxu0 0.0
  %923 = vmatprep.subr.mxu0 0.0
  %924 = vmatpush1.msra.mxu0 0.0
  %925 = vmatprep.subr.mxu0 0.0
  %926 = vmatpush1.msra.mxu0 0.0
  %927 = vmatprep.subr.mxu0 0.0
  %928 = vmatpush1.msra.mxu0 0.0
  %929 = vmatprep.subr.mxu0 0.0
  %930 = vmatpush1.msra.mxu0 0.0
  %931 = vmatprep.subr.mxu0 0.0
  %932 = vmatpush1.msra.mxu0 0.0
  %933 = vmatprep.subr.mxu0 0.0
  %934 = vmatpush1.msra.mxu0 0.0
  %935 = vmatprep.subr.mxu0 0.0
  %936 = vmatpush1.msra.mxu0 0.0
  %937 = vmatprep.subr.mxu0 0.0
  %938 = vmatpush1.msra.mxu0 0.0
  %939 = vmatprep.subr.mxu0 0.0
  %940 = vmatpush1.msra.mxu0 0.0
  %941 = vmatprep.mubr.f32.mxu0 0.0
  %942 = vmatmul.mubr.f32.gmra.mrb[0].mxu0 %v860
  %v943 = vpop.f32.mrb[0].mxu0
  %v944 = vadd.f32 %v856, %v943
  %v945 = vpop.f32.mrb[0].mxu0
  %946 = vmatprep.mubr.f32.mxu0 0.0
  %947 = vmatmul.mubr.f32.gmra.mrb[0].mxu0 %v863
  %v948 = vpop.f32.mrb[0].mxu0
  %v949 = vadd.f32 %v856, %v948
  %v950 = vpop.f32.mrb[0].mxu0
  %951 = vmatprep.mubr.f32.mxu0 0.0
  %952 = vmatmul.mubr.f32.gmra.mrb[0].mxu0 %v866
  %v953 = vpop.f32.mrb[0].mxu0
  %v954 = vadd.f32 %v856, %v953
  %v955 = vpop.f32.mrb[0].mxu0
  %956 = vmatprep.mubr.f32.mxu0 0.0
  %957 = vmatmul.mubr.f32.gmra.mrb[0].mxu0 %v869
  %v958 = vpop.f32.mrb[0].mxu0
  %v959 = vadd.f32 %v856, %v958
  %v960 = vpop.f32.mrb[0].mxu0
  %961 = vmatprep.mubr.f32.mxu0 0.0
  %962 = vmatmul.mubr.f32.gmra.mrb[0].mxu0 %v872
  %v963 = vpop.f32.mrb[0].mxu0
  %v964 = vadd.f32 %v856, %v963
  %v965 = vpop.f32.mrb[0].mxu0
  %966 = vmatprep.mubr.f32.mxu0 0.0
  %967 = vmatmul.mubr.f32.gmra.mrb[0].mxu0 %v875
  %v968 = vpop.f32.mrb[0].mxu0
  %v969 = vadd.f32 %v856, %v968
  %v970 = vpop.f32.mrb[0].mxu0
  %971 = vdwg.mxu0
  %972 = vst.msk [vmem:[%s6] sm:$0xff] %vm131, %v944
  %973 = vst.msk [vmem:[%s6 + $0x8] sm:$0xff] %vm131, %v949
  %974 = vst.msk [vmem:[%s6 + $0x10] sm:$0xff] %vm131, %v954
  %975 = vst.msk [vmem:[%s6 + $0x18] sm:$0xff] %vm131, %v959
  %976 = vst.msk [vmem:[%s6 + $0x20] sm:$0xff] %vm131, %v964
  %977 = vst.msk [vmem:[%s6 + $0x28] sm:$0xff] %vm131, %v969
  // Predicated region
  $region26: #{simple_timesnet_forward.1} parent=0 // pred_check
    _
  $region27: #{simple_timesnet_forward.1} parent=0 // pred_check_branch
    %979 = sbr.rel (0) target = $region29
  $region28: #{simple_timesnet_forward.1} parent=0 // pred_region
    _
  $region29: #{simple_timesnet_forward.1} parent=0 // pred_fallthru
    _
  // Predicated region
  $region30: #{simple_timesnet_forward.1} parent=0 // pred_check
    _
  $region31: #{simple_timesnet_forward.1} parent=0 // pred_check_branch
    %981 = sbr.rel (0) target = $region33
  $region32: #{simple_timesnet_forward.1} parent=0 // pred_region
    _
  $region33: #{simple_timesnet_forward.1} parent=0 // pred_fallthru
    _

</llo_original>
